<compile_context>
chip_gen: v7x
topology: tpu7x:2x2x1
jax: 0.10.0
libtpu: 0.0.40
codegen_flags: <defaults>
</compile_context>

<pallas_src>
import functools

import jax
import jax.numpy as jnp
from jax.experimental import pallas as pl
from jax.experimental.pallas import tpu as pltpu


# ---------------------------------------------------------------------------
# Parameter slab layout.  Hidden width fixed at 10 by the module spec.
# Every block starts on an 8-row boundary; columns 0:K used, rest zero.
# ---------------------------------------------------------------------------
_HID = 10
_SLAB_COLS = 128


def _round_up(n, m):
    return -(-n // m) * m


def _slab_layout(out_dim):
    """Row offsets (all multiples of 8) for the packed, transposed params."""
    w1t_lo = 0                                  # w1^T [10, 2]
    b1_lo = 16                                  # b1   [10, 1]
    w2t_lo = 32                                 # w2^T [10, 10]
    b2_lo = 48                                  # b2   [10, 1]
    w3t_lo = 64                                 # w3^T [out_dim, 10]
    b3_lo = w3t_lo + _round_up(out_dim, 8)      # b3   [out_dim, 1]
    rows = b3_lo + _round_up(out_dim, 8)
    return w1t_lo, b1_lo, w2t_lo, b2_lo, w3t_lo, b3_lo, rows


def pack_params(params):
    """Pack w1,b1,w2,b2,w3,b3 (transposed) into one [rows, 128] f32 slab."""
    w1, b1 = params["w1"], params["b1"]        # [2,10],  [1,10]
    w2, b2 = params["w2"], params["b2"]        # [10,10], [1,10]
    w3, b3 = params["w3"], params["b3"]        # [10,od], [1,od]
    out_dim = w3.shape[1]
    (w1t_lo, b1_lo, w2t_lo, b2_lo, w3t_lo, b3_lo, rows) = _slab_layout(out_dim)
    slab = jnp.zeros((rows, _SLAB_COLS), jnp.float32)
    slab = slab.at[w1t_lo:w1t_lo + _HID, 0:2].set(w1.T.astype(jnp.float32))
    slab = slab.at[b1_lo:b1_lo + _HID, 0:1].set(
        b1.reshape(_HID, 1).astype(jnp.float32))
    slab = slab.at[w2t_lo:w2t_lo + _HID, 0:_HID].set(w2.T.astype(jnp.float32))
    slab = slab.at[b2_lo:b2_lo + _HID, 0:1].set(
        b2.reshape(_HID, 1).astype(jnp.float32))
    slab = slab.at[w3t_lo:w3t_lo + out_dim, 0:_HID].set(
        w3.T.astype(jnp.float32))
    slab = slab.at[b3_lo:b3_lo + out_dim, 0:1].set(
        b3.reshape(out_dim, 1).astype(jnp.float32))
    return slab


# ---------------------------------------------------------------------------
# Kernel: x^T tile [2, TB] + packed params slab -> softmax probs [out_dim, TB]
# (batch lives on the lane axis; all stores are lane-dense).
# ---------------------------------------------------------------------------
def _mlp_softmax_kernel(xt_ref, p_ref, o_ref, *, out_dim):
    w1t_lo, b1_lo, w2t_lo, b2_lo, w3t_lo, b3_lo, _ = _slab_layout(out_dim)

    xt = xt_ref[...]                                      # [2, TB]  f32

    w1t = p_ref[w1t_lo:w1t_lo + _HID, 0:2]                # [10, 2]
    b1 = p_ref[b1_lo:b1_lo + _HID, 0:1]                   # [10, 1]
    w2t = p_ref[w2t_lo:w2t_lo + _HID, 0:_HID]             # [10, 10]
    b2 = p_ref[b2_lo:b2_lo + _HID, 0:1]                   # [10, 1]
    w3t = p_ref[w3t_lo:w3t_lo + out_dim, 0:_HID]          # [od, 10]
    b3 = p_ref[b3_lo:b3_lo + out_dim, 0:1]                # [od, 1]

    # fc1 (K=2): two broadcast FMAs on the VPU, no MXU pass.      [10, TB]
    h1 = w1t[:, 0:1] * xt[0:1, :] + w1t[:, 1:2] * xt[1:2, :] + b1
    h1 = jnp.maximum(h1, 0.0)

    # fc2: bf16 operands into the MXU, f32 accumulate.            [10, TB]
    h2 = jnp.dot(w2t.astype(jnp.bfloat16), h1.astype(jnp.bfloat16),
                 preferred_element_type=jnp.float32) + b2
    h2 = jnp.maximum(h2, 0.0)

    # fc3: bf16 MXU, f32 accumulate.                              [od, TB]
    logits = jnp.dot(w3t.astype(jnp.bfloat16), h2.astype(jnp.bfloat16),
                     preferred_element_type=jnp.float32) + b3

    # Softmax over the feature axis (axis 0); per-lane (per-batch) independent.
    m = jnp.max(logits, axis=0, keepdims=True)
    e = jnp.exp(logits - m)
    denom = jnp.sum(e, axis=0, keepdims=True)
    o_ref[...] = (e / denom).astype(o_ref.dtype)          # exact normalization


# ---------------------------------------------------------------------------
# Wrapper
# ---------------------------------------------------------------------------
def welfare_pg_forward(x, packed_params, out_dim, *,
                       max_batch_tile=8192, gridless_max=4096):
    """x: [B, 2] float32; packed_params: slab from pack_params(). -> [B, out_dim]"""
    B, F = x.shape
    assert F == 2, "WelfarePGLearner.fc1 takes 2 input features"
    kernel = functools.partial(_mlp_softmax_kernel, out_dim=out_dim)

    xt = x.T                                               # [2, B], one cheap transpose
    cost = pl.CostEstimate(
        flops=2 * B * (2 * _HID + _HID * _HID + _HID * out_dim),
        transcendentals=B * out_dim,
        bytes_accessed=4 * (B * (F + out_dim) + int(packed_params.size)),
    )

    if B <= gridless_max:
        # Grid-less call: full-array VMEM blocks, no pipeline prologue, 2 DMAs.
        out_t = pl.pallas_call(
            kernel,
            out_shape=jax.ShapeDtypeStruct((out_dim, B), jnp.float32),
            in_specs=[
                pl.BlockSpec(memory_space=pltpu.MemorySpace.VMEM),
                pl.BlockSpec(memory_space=pltpu.MemorySpace.VMEM),
            ],
            out_specs=pl.BlockSpec(memory_space=pltpu.MemorySpace.VMEM),
            cost_estimate=cost,
        )(xt, packed_params)
        return out_t.T

    # Large batch: tile the batch (lane axis).  tb is a multiple of 128 and is
    # capped so the grid has >= 2 steps ("parallel" -> both v7x TensorCores).
    tb = min(max_batch_tile, _round_up(pl.cdiv(B, 2), 128))
    n_tiles = pl.cdiv(B, tb)          # ragged tail handled by Pallas block padding
    slab_rows = packed_params.shape[0]

    out_t = pl.pallas_call(
        kernel,
        out_shape=jax.ShapeDtypeStruct((out_dim, B), jnp.float32),
        grid=(n_tiles,),
        in_specs=[
            pl.BlockSpec((F, tb), lambda i: (0, i)),
            pl.BlockSpec((slab_rows, _SLAB_COLS), lambda i: (0, 0)),
        ],
        out_specs=pl.BlockSpec((out_dim, tb), lambda i: (0, i)),
        compiler_params=pltpu.CompilerParams(
            dimension_semantics=("parallel",)),
        cost_estimate=cost,
    )(xt, packed_params)
    return out_t.T


# ---------------------------------------------------------------------------
# Init + pure-JAX reference
# ---------------------------------------------------------------------------
def init_params(key, num_actions):
    """Deterministic init mimicking nn.Linear default (uniform +-1/sqrt(fan_in))."""
    output_length = num_actions + 2
    dims = [(2, _HID), (_HID, _HID), (_HID, output_length)]
    params = {}
    keys = jax.random.split(key, 2 * len(dims))
    for idx, (fan_in, fan_out) in enumerate(dims):
        bound = 1.0 / jnp.sqrt(jnp.float32(fan_in))
        w = jax.random.uniform(keys[2 * idx], (fan_in, fan_out),
                               minval=-bound, maxval=bound, dtype=jnp.float32)
        b = jax.random.uniform(keys[2 * idx + 1], (1, fan_out),
                               minval=-bound, maxval=bound, dtype=jnp.float32)
        params[f"w{idx + 1}"] = w
        params[f"b{idx + 1}"] = b
    return params


def reference_forward(x, params):
    h1 = jnp.maximum(x @ params["w1"] + params["b1"], 0.0)
    h2 = jnp.maximum(h1 @ params["w2"] + params["b2"], 0.0)
    logits = h2 @ params["w3"] + params["b3"]
    return jax.nn.softmax(logits, axis=-1)


# TODO(synk): the Categorical sampling / log_prob and numpy feature building in
# `action()` / `step()` stay host-side; only the nn.Module forward is a kernel.

if __name__ == "__main__":
    key = jax.random.PRNGKey(0)
    k_param, k_x = jax.random.split(key)

    num_actions = 4                 # output_length = num_actions + 2 = 6
    out_dim = num_actions + 2
    batch = 8
    params = init_params(k_param, num_actions)
    packed = pack_params(params)

    # x mimics the concatenated features built in `action()`: a {0,1} flag and an offer.
    flag = jax.random.bernoulli(k_x, 0.5, (batch, 1)).astype(jnp.float32)
    offer = jax.random.uniform(jax.random.fold_in(k_x, 1), (batch, 1),
                               dtype=jnp.float32)
    x = jnp.concatenate([flag, offer], axis=-1)   # [B, 2]

    # --- small batch: grid-less path ---
    out = welfare_pg_forward(x, packed, out_dim)
    out = jax.block_until_ready(out)
    ref = reference_forward(x, params)
    assert out.shape == (batch, out_dim)
    # bf16 MXU operands (f32 accumulate) -> compare at a slightly looser tol.
    assert jnp.allclose(out, ref, atol=5e-3, rtol=5e-3)
    # Exact softmax normalization (no approx reciprocal).
    assert jnp.allclose(jnp.sum(out, axis=-1), 1.0, atol=1e-5)

    # --- large batch: tiled "parallel" path (2 grid steps, tb multiple of 128) ---
    big_b = 8192
    xb = jax.random.uniform(jax.random.fold_in(k_x, 2), (big_b, 2),
                            dtype=jnp.float32)
    out_big = welfare_pg_forward(xb, packed, out_dim)
    out_big = jax.block_until_ready(out_big)
    ref_big = reference_forward(xb, params)
    assert out_big.shape == (big_b, out_dim)
    assert jnp.allclose(out_big, ref_big, atol=5e-3, rtol=5e-3)
    assert jnp.allclose(jnp.sum(out_big, axis=-1), 1.0, atol=1e-5)

    print("KERNEL_OK")
</pallas_src>

<mosaic_0001>
module attributes {stable_mosaic.version = 11 : i64} {
  func.func @_mlp_softmax_kernel(%arg0: memref<2x8xf32, #tpu.memory_space<vmem>>, %arg1: memref<80x128xf32, #tpu.memory_space<vmem>>, %arg2: memref<6x8xf32, #tpu.memory_space<vmem>>) attributes {dimension_semantics = [], scalar_prefetch = 0 : i64, scratch_operands = 0 : i64, tpu.core_type = #tpu.core_type<tc>} {
    %c0 = arith.constant 0 : index
    %c0_0 = arith.constant 0 : index
    %0 = vector.load %arg0[%c0, %c0_0] : memref<2x8xf32, #tpu.memory_space<vmem>>, vector<2x8xf32>
    %c0_1 = arith.constant 0 : index
    %c0_2 = arith.constant 0 : index
    %1 = vector.load %arg1[%c0_1, %c0_2] : memref<80x128xf32, #tpu.memory_space<vmem>>, vector<10x2xf32>
    %c16 = arith.constant 16 : index
    %c0_3 = arith.constant 0 : index
    %2 = vector.load %arg1[%c16, %c0_3] : memref<80x128xf32, #tpu.memory_space<vmem>>, vector<10x1xf32>
    %c32 = arith.constant 32 : index
    %c0_4 = arith.constant 0 : index
    %3 = vector.load %arg1[%c32, %c0_4] : memref<80x128xf32, #tpu.memory_space<vmem>>, vector<10x10xf32>
    %c48 = arith.constant 48 : index
    %c0_5 = arith.constant 0 : index
    %4 = vector.load %arg1[%c48, %c0_5] : memref<80x128xf32, #tpu.memory_space<vmem>>, vector<10x1xf32>
    %c64 = arith.constant 64 : index
    %c0_6 = arith.constant 0 : index
    %5 = vector.load %arg1[%c64, %c0_6] : memref<80x128xf32, #tpu.memory_space<vmem>>, vector<6x10xf32>
    %c72 = arith.constant 72 : index
    %c0_7 = arith.constant 0 : index
    %6 = vector.load %arg1[%c72, %c0_7] : memref<80x128xf32, #tpu.memory_space<vmem>>, vector<6x1xf32>
    %7 = vector.extract_strided_slice %1 {offsets = [0, 0], sizes = [10, 1], strides = [1, 1]} : vector<10x2xf32> to vector<10x1xf32>
    %8 = vector.extract_strided_slice %0 {offsets = [0, 0], sizes = [1, 8], strides = [1, 1]} : vector<2x8xf32> to vector<1x8xf32>
    %9 = vector.broadcast %7 : vector<10x1xf32> to vector<10x8xf32>
    %10 = vector.broadcast %8 : vector<1x8xf32> to vector<10x8xf32>
    %11 = arith.mulf %9, %10 : vector<10x8xf32>
    %12 = vector.extract_strided_slice %1 {offsets = [0, 1], sizes = [10, 1], strides = [1, 1]} : vector<10x2xf32> to vector<10x1xf32>
    %13 = vector.extract_strided_slice %0 {offsets = [1, 0], sizes = [1, 8], strides = [1, 1]} : vector<2x8xf32> to vector<1x8xf32>
    %14 = vector.broadcast %12 : vector<10x1xf32> to vector<10x8xf32>
    %15 = vector.broadcast %13 : vector<1x8xf32> to vector<10x8xf32>
    %16 = arith.mulf %14, %15 : vector<10x8xf32>
    %17 = arith.addf %11, %16 : vector<10x8xf32>
    %18 = vector.broadcast %2 : vector<10x1xf32> to vector<10x8xf32>
    %19 = arith.addf %17, %18 : vector<10x8xf32>
    %cst = arith.constant 0.000000e+00 : f32
    %20 = vector.broadcast %cst : f32 to vector<10x8xf32>
    %21 = arith.maximumf %19, %20 : vector<10x8xf32>
    %22 = arith.truncf %3 : vector<10x10xf32> to vector<10x10xbf16>
    %23 = arith.truncf %21 : vector<10x8xf32> to vector<10x8xbf16>
    %cst_8 = arith.constant dense<0.000000e+00> : vector<10x8xf32>
    %24 = tpu.matmul %22, %23, %cst_8 {dimension_numbers = #tpu.dot_dimension_numbers<[1], [0], [0], [1], [0, 0, 1, 1], [], []>} : vector<10x10xbf16>, vector<10x8xbf16>, vector<10x8xf32> -> vector<10x8xf32>
    %25 = vector.broadcast %4 : vector<10x1xf32> to vector<10x8xf32>
    %26 = arith.addf %24, %25 : vector<10x8xf32>
    %cst_9 = arith.constant 0.000000e+00 : f32
    %27 = vector.broadcast %cst_9 : f32 to vector<10x8xf32>
    %28 = arith.maximumf %26, %27 : vector<10x8xf32>
    %29 = arith.truncf %5 : vector<6x10xf32> to vector<6x10xbf16>
    %30 = arith.truncf %28 : vector<10x8xf32> to vector<10x8xbf16>
    %cst_10 = arith.constant dense<0.000000e+00> : vector<6x8xf32>
    %31 = tpu.matmul %29, %30, %cst_10 {dimension_numbers = #tpu.dot_dimension_numbers<[1], [0], [0], [1], [0, 0, 1, 1], [], []>} : vector<6x10xbf16>, vector<10x8xbf16>, vector<6x8xf32> -> vector<6x8xf32>
    %32 = vector.broadcast %6 : vector<6x1xf32> to vector<6x8xf32>
    %33 = arith.addf %31, %32 : vector<6x8xf32>
    %cst_11 = arith.constant dense<0xFF800000> : vector<8xf32>
    %34 = vector.multi_reduction <maximumf>, %33, %cst_11 [0] : vector<6x8xf32> to vector<8xf32>
    %35 = vector.shape_cast %34 : vector<8xf32> to vector<1x8xf32>
    %36 = vector.broadcast %35 : vector<1x8xf32> to vector<6x8xf32>
    %37 = arith.subf %33, %36 : vector<6x8xf32>
    %38 = math.exp %37 : vector<6x8xf32>
    %cst_12 = arith.constant dense<0.000000e+00> : vector<8xf32>
    %39 = vector.multi_reduction <add>, %38, %cst_12 [0] : vector<6x8xf32> to vector<8xf32>
    %40 = vector.shape_cast %39 : vector<8xf32> to vector<1x8xf32>
    %41 = vector.broadcast %40 : vector<1x8xf32> to vector<6x8xf32>
    %42 = arith.divf %38, %41 : vector<6x8xf32>
    %c0_13 = arith.constant 0 : index
    %c0_14 = arith.constant 0 : index
    %43 = vector.load %arg2[%c0_13, %c0_14] : memref<6x8xf32, #tpu.memory_space<vmem>>, vector<6x8xf32>
    tpu.vector_store %arg2[%c0_13, %c0_14], %42 {strides = array<i32>} : memref<6x8xf32, #tpu.memory_space<vmem>>, vector<6x8xf32>,
    return
  }
}

</mosaic_0001>

<llo_original>
// kernel: tpu_custom_call.1
$region0: #{tpu_custom_call.1}
  #allocation0 [shape = 'u32[]', space=smem, size = 0x4, offset = 0x4, fixed_abs, tag = 'smem constant byte address 0x4 - core index']
  #allocation1 [shape = 'u32[144,128]{1,0:T(1,128)}', space=vmem, size = 0x12000, scoped, tag = 'internal scratch']
  %s0 = inlined_call_operand.hbm [shape: f32[2,8], index: 0, kind: input, shape index: {}]
  %s1 = inlined_call_operand.hbm [shape: f32[80,128], index: 1, kind: input, shape index: {}]
  %s2 = inlined_call_operand.hbm [shape: f32[6,8], index: 2, kind: output, shape index: {}]
  %s3 = sld [smem:[#allocation0]]
  $region26: #{tpu_custom_call.1} parent=0
    _
  %s5 = ssub.s32 1, %s3
  %s6 = scalar_select 0, %s5, %s3
  $region1: #{tpu_custom_call.1} parent=0
    #allocation2 [shape = 'u8[1024]{0}', space=vmem, size = 0x400, scoped, tag = 'input window, operand 0, single buffered']
    #allocation3 [shape = 's32[1]{0}', space=sflag, size = 0x4, scoped, tag = 'scoped memory for tpu_custom_call.1']
    #allocation4 [shape = 's32[1]{0}', space=sflag, size = 0x4, scoped, tag = 'scoped memory for tpu_custom_call.1']
    #allocation5 [shape = 'u8[40960]{0}', space=vmem, size = 0xa000, scoped, tag = 'input window, operand 1, single buffered']
    #allocation6 [shape = 's32[1]{0}', space=sflag, size = 0x4, scoped, tag = 'scoped memory for tpu_custom_call.1']
    #allocation7 [shape = 'u8[4096]{0}', space=vmem, size = 0x1000, scoped, tag = 'output window, operand 0, single buffered']
    %7 = vsyncpa [#allocation3], 0
    %8 = vsyncpa [#allocation6], 0
    %9 = vsyncpa [#allocation4], 0
    // Predicated region
    $region2: #{tpu_custom_call.1} parent=1 // pred_check
      _
    $region3: #{tpu_custom_call.1} parent=1 // pred_check_branch
      %11 = sbr.rel (0) target = $region5
    $region4: #{tpu_custom_call.1} parent=1 // pred_region
      %s13 = ssub.s32 32, 32
      %14 = vsyncadd [#allocation3], %s13
      %s16 = sshll.u32 [#allocation2], 4
      %s17 = int_to_ptr.vmem [resolvable:$true] %s16
      %19 = dma.hbm_to_vmem [thread:$0]  %s0, 32, %s17, [#allocation3]
    $region5: #{tpu_custom_call.1} parent=1 // pred_fallthru
      _
    // Predicated region
    $region6: #{tpu_custom_call.1} parent=1 // pred_check
      _
    $region7: #{tpu_custom_call.1} parent=1 // pred_check_branch
      %21 = sbr.rel (0) target = $region9
    $region8: #{tpu_custom_call.1} parent=1 // pred_region
      %s23 = ssub.s32 1280, 1280
      %24 = vsyncadd [#allocation6], %s23
      %s25 = sshll.u32 [#allocation5], 4
      %s26 = int_to_ptr.vmem [resolvable:$true] %s25
      %31 = dma.hbm_to_vmem [thread:$0]  %s1, 1280, %s26, [#allocation6], 128, 128, 8
    $region9: #{tpu_custom_call.1} parent=1 // pred_fallthru
      _
    // Predicated region
    $region10: #{tpu_custom_call.1} parent=1 // pred_check
      _
    $region11: #{tpu_custom_call.1} parent=1 // pred_check_branch
      %33 = sbr.rel (0) target = $region13
    $region12: #{tpu_custom_call.1} parent=1 // pred_region
      %34 = dma.done [#allocation3], 32
    $region13: #{tpu_custom_call.1} parent=1 // pred_fallthru
      _
    // Predicated region
    $region14: #{tpu_custom_call.1} parent=1 // pred_check
      _
    $region15: #{tpu_custom_call.1} parent=1 // pred_check_branch
      %36 = sbr.rel (0) target = $region17
    $region16: #{tpu_custom_call.1} parent=1 // pred_region
      %37 = dma.done [#allocation6], 1280
    $region17: #{tpu_custom_call.1} parent=1 // pred_fallthru
      _
    %v39 = vld [vmem:[#allocation2] sm:$0x3]
    %v40 = vld [vmem:[#allocation5] sm:$0xff]
    %v41 = vld [vmem:[#allocation5 + $0x8] sm:$0x3]
    %v42 = vld [vmem:[#allocation5 + $0x10] sm:$0xff]
    %v43 = vld [vmem:[#allocation5 + $0x18] sm:$0x3]
    %v44 = vld [vmem:[#allocation5 + $0x20] sm:$0xff]
    %v45 = vld [vmem:[#allocation5 + $0x28] sm:$0x3]
    %v46 = vld [vmem:[#allocation5 + $0x30] sm:$0xff]
    %v47 = vld [vmem:[#allocation5 + $0x38] sm:$0x3]
    %v48 = vld [vmem:[#allocation5 + $0x40] sm:$0x3f]
    %v49 = vld [vmem:[#allocation5 + $0x48] sm:$0x3f]
    %51 = vset.pattern.permute.xlu0 0
    %52 = vperm.xlu0 %51, %v40
    %v53 = vpop.permute.xlu0 %52
    %56 = vset.pattern.permute.xlu0 0
    %57 = vperm.xlu0 %56, %v41
    %v58 = vpop.permute.xlu0 %57
    %v60 = vlaneseq
    %v61 = vshrl.u32 %v60, 7
    %v62 = vsub.s32 0, %v61
    %v63 = vrot.slane %v39, %v62
    %v64 = vmul.f32 %v53, %v63
    %v65 = vmul.f32 %v58, %v63
    %66 = vset.pattern.permute.xlu0 1
    %67 = vperm.xlu0 %66, %v40
    %v68 = vpop.permute.xlu0 %67
    %70 = vset.pattern.permute.xlu0 1
    %71 = vperm.xlu0 %70, %v41
    %v72 = vpop.permute.xlu0 %71
    %v74 = vlaneseq
    %v75 = vshrl.u32 %v74, 7
    %v76 = vsub.s32 1, %v75
    %v77 = vrot.slane %v39, %v76
    %v78 = vmul.f32 %v68, %v77
    %v79 = vmul.f32 %v72, %v77
    %v80 = vadd.f32 %v64, %v78
    %v81 = vadd.f32 %v65, %v79
    %83 = vset.pattern.permute.xlu0 0
    %84 = vperm.xlu0 %83, %v42
    %v85 = vpop.permute.xlu0 %84
    %88 = vset.pattern.permute.xlu0 0
    %89 = vperm.xlu0 %88, %v43
    %v90 = vpop.permute.xlu0 %89
    %v92 = vadd.f32 %v80, %v85
    %v93 = vadd.f32 %v81, %v90
    %v94 = vmax.f32 %v92, 0.0
    %v95 = vmax.f32 %v93, 0.0
    %v96 = vpack.c.bf16 %v45, %v44
    %v97 = vpack.c.bf16 %v95, %v94
    %99 = vset.pattern.permute.xlu0 0
    %100 = vperm.xlu0 %99, %v46
    %v101 = vpop.permute.xlu0 %100
    %104 = vset.pattern.permute.xlu0 0
    %105 = vperm.xlu0 %104, %v47
    %v106 = vpop.permute.xlu0 %105
    %vm108 = vcmask 80896
    %v110 = vsel %vm108, %v96, 0
    %vm112 = vcmask 1044480
    %v114 = vsel %vm112, %v97, 0
    %116 = vmatprep.subr.bf16.mxu0 0
    %117 = vmatpush1.bf16.msra.mxu0 %v114
    %118 = vmatprep.subr.bf16.mxu0 0
    %119 = vmatpush1.bf16.msra.mxu0 0
    %120 = vmatprep.subr.bf16.mxu0 0
    %121 = vmatpush1.bf16.msra.mxu0 0
    %122 = vmatprep.subr.bf16.mxu0 0
    %123 = vmatpush1.bf16.msra.mxu0 0
    %124 = vmatprep.subr.bf16.mxu0 0
    %125 = vmatpush1.bf16.msra.mxu0 0
    %126 = vmatprep.subr.bf16.mxu0 0
    %127 = vmatpush1.bf16.msra.mxu0 0
    %128 = vmatprep.subr.bf16.mxu0 0
    %129 = vmatpush1.bf16.msra.mxu0 0
    %130 = vmatprep.subr.bf16.mxu0 0
    %131 = vmatpush1.bf16.msra.mxu0 0
    %132 = vmatprep.subr.bf16.mxu0 0
    %133 = vmatpush1.bf16.msra.mxu0 0
    %134 = vmatprep.subr.bf16.mxu0 0
    %135 = vmatpush1.bf16.msra.mxu0 0
    %136 = vmatprep.subr.bf16.mxu0 0
    %137 = vmatpush1.bf16.msra.mxu0 0
    %138 = vmatprep.subr.bf16.mxu0 0
    %139 = vmatpush1.bf16.msra.mxu0 0
    %140 = vmatprep.subr.bf16.mxu0 0
    %141 = vmatpush1.bf16.msra.mxu0 0
    %142 = vmatprep.subr.bf16.mxu0 0
    %143 = vmatpush1.bf16.msra.mxu0 0
    %144 = vmatprep.subr.bf16.mxu0 0
    %145 = vmatpush1.bf16.msra.mxu0 0
    %146 = vmatprep.subr.bf16.mxu0 0
    %147 = vmatpush1.bf16.msra.mxu0 0
    %148 = vmatprep.mubr.bf16.mxu0 0
    %149 = vmatmul.mubr.bf16.gmra.mrb[0].mxu0 %v110
    %v150 = vpop.f32.mrb[0].mxu0
    %v151 = vadd.f32 %v101, %v150
    %v152 = vpop.f32.mrb[0].mxu0
    %v153 = vpop.f32.mrb[0].mxu0
    %v154 = vadd.f32 %v106, %v153
    %v155 = vpop.f32.mrb[0].mxu0
    %156 = vdwg.mxu0
    %v157 = vmax.f32 %v151, 0.0
    %v158 = vmax.f32 %v154, 0.0
    %v159 = vpack.c.bf16 %v48, %v48
    %v160 = vpack.c.bf16 %v158, %v157
    %162 = vset.pattern.permute.xlu0 0
    %163 = vperm.xlu0 %162, %v49
    %v164 = vpop.permute.xlu0 %163
    %v167 = vsel %vm108, %v159, 0
    %v170 = vsel %vm112, %v160, 0
    %172 = vmatprep.subr.bf16.mxu0 0
    %173 = vmatpush1.bf16.msra.mxu0 %v170
    %174 = vmatprep.subr.bf16.mxu0 0
    %175 = vmatpush1.bf16.msra.mxu0 0
    %176 = vmatprep.subr.bf16.mxu0 0
    %177 = vmatpush1.bf16.msra.mxu0 0
    %178 = vmatprep.subr.bf16.mxu0 0
    %179 = vmatpush1.bf16.msra.mxu0 0
    %180 = vmatprep.subr.bf16.mxu0 0
    %181 = vmatpush1.bf16.msra.mxu0 0
    %182 = vmatprep.subr.bf16.mxu0 0
    %183 = vmatpush1.bf16.msra.mxu0 0
    %184 = vmatprep.subr.bf16.mxu0 0
    %185 = vmatpush1.bf16.msra.mxu0 0
    %186 = vmatprep.subr.bf16.mxu0 0
    %187 = vmatpush1.bf16.msra.mxu0 0
    %188 = vmatprep.subr.bf16.mxu0 0
    %189 = vmatpush1.bf16.msra.mxu0 0
    %190 = vmatprep.subr.bf16.mxu0 0
    %191 = vmatpush1.bf16.msra.mxu0 0
    %192 = vmatprep.subr.bf16.mxu0 0
    %193 = vmatpush1.bf16.msra.mxu0 0
    %194 = vmatprep.subr.bf16.mxu0 0
    %195 = vmatpush1.bf16.msra.mxu0 0
    %196 = vmatprep.subr.bf16.mxu0 0
    %197 = vmatpush1.bf16.msra.mxu0 0
    %198 = vmatprep.subr.bf16.mxu0 0
    %199 = vmatpush1.bf16.msra.mxu0 0
    %200 = vmatprep.subr.bf16.mxu0 0
    %201 = vmatpush1.bf16.msra.mxu0 0
    %202 = vmatprep.subr.bf16.mxu0 0
    %203 = vmatpush1.bf16.msra.mxu0 0
    %204 = vmatprep.mubr.bf16.mxu0 0
    %205 = vmatmul.mubr.bf16.gmra.mrb[0].mxu0 %v167
    %v206 = vpop.f32.mrb[0].mxu0
    %v207 = vadd.f32 %v164, %v206
    %v208 = vpop.f32.mrb[0].mxu0
    %v209 = vpop.f32.mrb[0].mxu0
    %v210 = vpop.f32.mrb[0].mxu0
    %211 = vdwg.mxu0
    %vm212 = vcmask 62464
    %v213 = vsel %vm212, %v207, -inf
    %v214 = vrot.slane %v213, 4
    %v215 = vmax.f32 %v213, %v214
    %v216 = vrot.slane %v215, 2
    %v217 = vmax.f32 %v215, %v216
    %v218 = vrot.slane %v217, 1
    %v219 = vmax.f32 %v217, %v218
    %v220 = vsub.f32 %v207, %v219
    %v221 = vmul.f32 %v220, 1.442695
    %v222 = vpow.pop %v221
    %v223 = vsel %vm212, %v222, 0.0
    %v224 = vrot.slane %v223, 4
    %v225 = vadd.f32 %v223, %v224
    %v226 = vrot.slane %v225, 2
    %v227 = vadd.f32 %v225, %v226
    %v228 = vrot.slane %v227, 1
    %v229 = vadd.f32 %v227, %v228
    %v230 = vrcp.pop %v229
    %v231 = vmul.f32 %v222, %v230
    %232 = vst.msk [vmem:[#allocation7] sm:$0x3f] %vm212, %v231
    // Predicated region
    $region18: #{tpu_custom_call.1} parent=1 // pred_check
      _
    $region19: #{tpu_custom_call.1} parent=1 // pred_check_branch
      %234 = sbr.rel (0) target = $region21
    $region20: #{tpu_custom_call.1} parent=1 // pred_region
      %s236 = ssub.s32 128, 128
      %237 = vsyncadd [#allocation4], %s236
      %s239 = sshll.u32 [#allocation7], 4
      %s240 = int_to_ptr.vmem [resolvable:$true] %s239
      %242 = dma.vmem_to_hbm [thread:$0]  %s240, 128, %s2, [#allocation4]
    $region21: #{tpu_custom_call.1} parent=1 // pred_fallthru
      _
    // Predicated region
    $region22: #{tpu_custom_call.1} parent=1 // pred_check
      _
    $region23: #{tpu_custom_call.1} parent=1 // pred_check_branch
      %244 = sbr.rel (0) target = $region25
    $region24: #{tpu_custom_call.1} parent=1 // pred_region
      %245 = dma.done [#allocation4], 128
    $region25: #{tpu_custom_call.1} parent=1 // pred_fallthru
      _
    %246 = vsyncpa [#allocation3], 1
    %247 = vsyncpa [#allocation6], 1
    %248 = vsyncpa [#allocation4], 1

</llo_original>
